<compile_context>
chip_gen: v5e
topology: v5e:2x2
jax: 0.10.0
libtpu: 0.0.40
codegen_flags: <defaults>
</compile_context>

<pallas_src>
import functools

import jax
import jax.numpy as jnp
from jax.experimental import pallas as pl
from jax.experimental.pallas import tpu as pltpu

LANE = 128           # lane width: OUT is padded to a multiple of this
MAX_BLOCK_B = 1024   # batch tile rows per grid step (bf16 tiles; VMEM-safe)


def linear_kernel(x_ref, w_ref, b_ref, o_ref):
    # x_ref: (block_b, IN) bf16, w_ref: (IN, OUT_pad) bf16,
    # b_ref: (1, OUT_pad) f32,   o_ref: (block_b, OUT_pad) f32
    acc = jnp.dot(x_ref[...], w_ref[...], preferred_element_type=jnp.float32)
    o_ref[...] = acc + b_ref[...]


def _round_up(n, m):
    return ((n + m - 1) // m) * m


def prepare_params(w, b, compute_dtype=jnp.bfloat16):
    """One-time (model-build) param prep: pad OUT to 128 lanes, cast w to bf16.

    w: (IN, OUT) float32  (transposed from PyTorch's (OUT, IN) layout)
    b: (OUT,)    float32
    returns: w_pad (IN, OUT_pad) compute_dtype, b_pad (1, OUT_pad) float32
    """
    in_features, num_classes = w.shape
    out_pad = _round_up(num_classes, LANE)
    if out_pad != num_classes:
        w = jnp.pad(w, ((0, 0), (0, out_pad - num_classes)))
        b = jnp.pad(b, (0, out_pad - num_classes))
    w_pad = w.astype(compute_dtype)
    b_pad = b.reshape(1, out_pad).astype(jnp.float32)
    return w_pad, b_pad


@functools.partial(jax.jit, static_argnames=("num_classes",))
def neuralnet_forward(x, w_pad, b_pad, *, num_classes):
    """Forward pass of NeuralNet: flatten(start_dim=1) -> Linear.

    x:     (B, C, H, W) float32 (NCHW, like PyTorch)
    w_pad: (IN, OUT_pad) bf16/f32  (from prepare_params)
    b_pad: (1, OUT_pad)  float32   (from prepare_params)
    returns: (B, num_classes) float32
    """
    B = x.shape[0]
    # nn.Flatten(start_dim=1) + cast to the (bf16) compute dtype of the weight.
    x_flat = x.reshape(B, -1).astype(w_pad.dtype)
    in_features = x_flat.shape[1]
    assert in_features == w_pad.shape[0], "flattened input mismatches weight"
    out_pad = w_pad.shape[1]

    # --- batch tiling --------------------------------------------------------
    # Guarantee >=2 grid steps when B > 8 so the "parallel" axis can be sharded
    # across both TensorCores on v7x; single block (full extent) for tiny B.
    if B <= 8:
        block_b = B
    else:
        block_b = min(MAX_BLOCK_B, _round_up(pl.cdiv(B, 2), 8))
    grid_b = pl.cdiv(B, block_b)

    # --- explicit VMEM budget (x double-buffered, w/b single, out double) ----
    x_item = jnp.dtype(x_flat.dtype).itemsize
    w_item = jnp.dtype(w_pad.dtype).itemsize
    tile_bytes = (2 * block_b * in_features * x_item
                  + in_features * out_pad * w_item
                  + out_pad * 4
                  + 2 * block_b * out_pad * 4)
    vmem_limit = min(max(int(1.5 * tile_bytes) + (2 << 20), 32 << 20), 48 << 20)

    cost = pl.CostEstimate(
        flops=2 * B * in_features * out_pad,
        transcendentals=0,
        bytes_accessed=(B * in_features * x_item
                        + in_features * out_pad * w_item
                        + out_pad * 4
                        + B * out_pad * 4),
    )

    out = pl.pallas_call(
        linear_kernel,
        out_shape=jax.ShapeDtypeStruct((B, out_pad), jnp.float32),
        grid_spec=pltpu.PrefetchScalarGridSpec(
            num_scalar_prefetch=0,
            grid=(grid_b,),
            in_specs=[
                # K block dim = full array extent: legal even if not %128,
                # so no wrapper-side pad/copy of the activation is needed.
                pl.BlockSpec((block_b, in_features), lambda i: (i, 0)),
                # Grid-constant blocks: single-buffer to save VMEM.
                pl.BlockSpec((in_features, out_pad), lambda i: (0, 0),
                             pipeline_mode=pl.Buffered(1)),
                pl.BlockSpec((1, out_pad), lambda i: (0, 0),
                             pipeline_mode=pl.Buffered(1)),
            ],
            out_specs=pl.BlockSpec((block_b, out_pad), lambda i: (i, 0)),
        ),
        compiler_params=pltpu.CompilerParams(
            dimension_semantics=("parallel",),
            vmem_limit_bytes=vmem_limit),
        cost_estimate=cost,
    )(x_flat, w_pad, b_pad)

    # TODO(synk): if in_features ever outgrows the VMEM budget (half threshold
    # on v7x's 64 MiB), add a K grid axis ("arbitrary", last) with a
    # pl.when-initialized f32 accumulator instead of shrinking block_b.
    return out[:, :num_classes]


if __name__ == "__main__":
    key = jax.random.PRNGKey(0)
    k_x, k_w, k_b = jax.random.split(key, 3)

    # NOTE: at B=2 this is launch-overhead dominated on any generation; the
    # tiling/bf16 choices above target realistic batch sizes.
    B, C, H, W = 2, 8, 16, 16          # C*H*W = 2048 = in_features
    in_features = C * H * W
    num_classes = 11

    x = jax.random.normal(k_x, (B, C, H, W), dtype=jnp.float32)
    # Deterministic parameter init (mimic nn.Linear uniform bound, fixed seed).
    bound = 1.0 / (in_features ** 0.5)
    w = jax.random.uniform(k_w, (in_features, num_classes),
                           minval=-bound, maxval=bound, dtype=jnp.float32)
    b = jax.random.uniform(k_b, (num_classes,),
                           minval=-bound, maxval=bound, dtype=jnp.float32)

    # One-time padding / bf16 cast of the parameters (outside the hot path).
    w_pad, b_pad = prepare_params(w, b, compute_dtype=jnp.bfloat16)

    y = neuralnet_forward(x, w_pad, b_pad, num_classes=num_classes)
    jax.block_until_ready(y)

    # Reference check in plain JAX (f32). Tolerance reflects bf16 inputs with
    # f32 accumulation.
    y_ref = x.reshape(B, -1) @ w + b
    assert y.shape == (B, num_classes)
    assert jnp.allclose(y, y_ref, atol=3e-2, rtol=3e-2), (
        float(jnp.max(jnp.abs(y - y_ref))))

    print("KERNEL_OK")
</pallas_src>

<mosaic_0001>
module attributes {stable_mosaic.version = 11 : i64} {
  func.func @linear_kernel(%arg0: i32, %arg1: memref<2x2048xbf16, #tpu.memory_space<vmem>>, %arg2: memref<2048x128xbf16, #tpu.memory_space<vmem>>, %arg3: memref<1x128xf32, #tpu.memory_space<vmem>>, %arg4: memref<2x128xf32, #tpu.memory_space<vmem>>) attributes {dimension_semantics = [#tpu.dimension_semantics<parallel>], iteration_bounds = array<i64: 1>, scalar_prefetch = 0 : i64, scratch_operands = 0 : i64, tpu.core_type = #tpu.core_type<tc>, window_params = [{transform_indices = @transform_0, window_bounds = array<i64: 2, 2048>}, {pipeline_mode = #tpu.pipeline_mode<synchronous>, transform_indices = @transform_1, window_bounds = array<i64: 2048, 128>}, {pipeline_mode = #tpu.pipeline_mode<synchronous>, transform_indices = @transform_2, window_bounds = array<i64: 1, 128>}, {transform_indices = @transform_3, window_bounds = array<i64: 2, 128>}]} {
    %c0 = arith.constant 0 : index
    %c0_0 = arith.constant 0 : index
    %0 = vector.load %arg1[%c0, %c0_0] : memref<2x2048xbf16, #tpu.memory_space<vmem>>, vector<2x2048xbf16>
    %c0_1 = arith.constant 0 : index
    %c0_2 = arith.constant 0 : index
    %1 = vector.load %arg2[%c0_1, %c0_2] : memref<2048x128xbf16, #tpu.memory_space<vmem>>, vector<2048x128xbf16>
    %cst = arith.constant dense<0.000000e+00> : vector<2x128xf32>
    %2 = tpu.matmul %0, %1, %cst {dimension_numbers = #tpu.dot_dimension_numbers<[1], [0], [0], [1], [0, 0, 1, 1], [], []>} : vector<2x2048xbf16>, vector<2048x128xbf16>, vector<2x128xf32> -> vector<2x128xf32>
    %c0_3 = arith.constant 0 : index
    %c0_4 = arith.constant 0 : index
    %3 = vector.load %arg3[%c0_3, %c0_4] : memref<1x128xf32, #tpu.memory_space<vmem>>, vector<1x128xf32>
    %4 = vector.broadcast %3 : vector<1x128xf32> to vector<2x128xf32>
    %5 = arith.addf %2, %4 : vector<2x128xf32>
    %c0_5 = arith.constant 0 : index
    %c0_6 = arith.constant 0 : index
    %6 = vector.load %arg4[%c0_5, %c0_6] : memref<2x128xf32, #tpu.memory_space<vmem>>, vector<2x128xf32>
    tpu.vector_store %arg4[%c0_5, %c0_6], %5 {strides = array<i32>} : memref<2x128xf32, #tpu.memory_space<vmem>>, vector<2x128xf32>,
    return
  }
  func.func @transform_0(%arg0: i32) -> (i32, i32) {
    %c0_i32 = arith.constant 0 : i32
    %c0_i32_0 = arith.constant 0 : i32
    return %arg0, %c0_i32 : i32, i32
  }
  func.func @transform_1(%arg0: i32) -> (i32, i32) {
    %c0_i32 = arith.constant 0 : i32
    %c0_i32_0 = arith.constant 0 : i32
    %c0_i32_1 = arith.constant 0 : i32
    return %c0_i32, %c0_i32_0 : i32, i32
  }
  func.func @transform_2(%arg0: i32) -> (i32, i32) {
    %c0_i32 = arith.constant 0 : i32
    %c0_i32_0 = arith.constant 0 : i32
    %c0_i32_1 = arith.constant 0 : i32
    return %c0_i32, %c0_i32_0 : i32, i32
  }
  func.func @transform_3(%arg0: i32) -> (i32, i32) {
    %c0_i32 = arith.constant 0 : i32
    %c0_i32_0 = arith.constant 0 : i32
    return %arg0, %c0_i32 : i32, i32
  }
}

</mosaic_0001>

<llo_original>
// kernel: neuralnet_forward.1
$region0: #{neuralnet_forward.1}
  #allocation0 [shape = 'u32[]', space=smem, size = 0x4, offset = 0x4, fixed_abs, tag = 'smem constant byte address 0x4 - core index']
  #allocation1 [shape = 'u32[72,128]{1,0:T(1,128)}', space=vmem, size = 0x9000, scoped, tag = 'internal scratch']
  %s0 = inlined_call_operand.vmem [shape: bf16[2,2048], index: 0, kind: input, shape index: {}]
  %s1 = inlined_call_operand.hbm [shape: bf16[2048,128], index: 1, kind: input, shape index: {}]
  %s2 = inlined_call_operand.vmem [shape: f32[1,128], index: 2, kind: input, shape index: {}]
  %s3 = inlined_call_operand.hbm [shape: f32[2,128], index: 3, kind: output, shape index: {}]
  %s4 = sld [smem:[#allocation0]]
  $region26: #{neuralnet_forward.1} parent=0
    _
  %s6 = ssub.s32 1, %s4
  %s7 = scalar_select 0, %s6, %s4
  $region1: #{neuralnet_forward.1} parent=0
    #allocation2 [shape = 'u8[524288]{0}', space=vmem, size = 0x80000, scoped, tag = 'input window, operand 1, single buffered']
    #allocation3 [shape = 's32[1]{0}', space=sflag, size = 0x4, scoped, tag = 'scoped memory for neuralnet_forward.1']
    #allocation4 [shape = 's32[1]{0}', space=sflag, size = 0x4, scoped, tag = 'scoped memory for neuralnet_forward.1']
    #allocation5 [shape = 'u8[1024]{0}', space=vmem, size = 0x400, scoped, tag = 'output window, operand 0, single buffered']
    %8 = vsyncpa [#allocation3], 0
    %9 = vsyncpa [#allocation4], 0
    // Predicated region
    $region2: #{neuralnet_forward.1} parent=1 // pred_check
      _
    $region3: #{neuralnet_forward.1} parent=1 // pred_check_branch
      %11 = sbr.rel (0) target = $region5
    $region4: #{neuralnet_forward.1} parent=1 // pred_region
      _
    $region5: #{neuralnet_forward.1} parent=1 // pred_fallthru
      _
    // Predicated region
    $region6: #{neuralnet_forward.1} parent=1 // pred_check
      _
    $region7: #{neuralnet_forward.1} parent=1 // pred_check_branch
      %13 = sbr.rel (0) target = $region9
    $region8: #{neuralnet_forward.1} parent=1 // pred_region
      %15 = vsyncadd [#allocation3], 0
      %s16 = sshll.u32 %s1, 4
      %s17 = int_to_ptr.hbm [resolvable:$true] %s16
      %s18 = sshll.u32 [#allocation2], 4
      %s19 = int_to_ptr.vmem [resolvable:$true] %s18
      %24 = dma.hbm_to_vmem [thread:$0]  %s17, 16384, %s19, [#allocation3], 64, 64, 4
    $region9: #{neuralnet_forward.1} parent=1 // pred_fallthru
      _
    // Predicated region
    $region10: #{neuralnet_forward.1} parent=1 // pred_check
      _
    $region11: #{neuralnet_forward.1} parent=1 // pred_check_branch
      %26 = sbr.rel (0) target = $region13
    $region12: #{neuralnet_forward.1} parent=1 // pred_region
      _
    $region13: #{neuralnet_forward.1} parent=1 // pred_fallthru
      _
    // Predicated region
    $region14: #{neuralnet_forward.1} parent=1 // pred_check
      _
    $region15: #{neuralnet_forward.1} parent=1 // pred_check_branch
      %28 = sbr.rel (0) target = $region17
    $region16: #{neuralnet_forward.1} parent=1 // pred_region
      %30 = dma.done [#allocation3], 16384
    $region17: #{neuralnet_forward.1} parent=1 // pred_fallthru
      _
    %v31 = vld [vmem:[%s0] sm:$0xff]
    %v32 = vld [vmem:[%s0 + $0x8] sm:$0xff]
    %v33 = vld [vmem:[#allocation2] sm:$0xf]
    %v34 = vld [vmem:[#allocation2 + $0x4] sm:$0xf]
    %v35 = vld [vmem:[#allocation2 + $0x8] sm:$0xf]
    %v36 = vld [vmem:[#allocation2 + $0xc] sm:$0xf]
    %v37 = vld [vmem:[#allocation2 + $0x10] sm:$0xf]
    %v38 = vld [vmem:[#allocation2 + $0x14] sm:$0xf]
    %v39 = vld [vmem:[#allocation2 + $0x18] sm:$0xf]
    %v40 = vld [vmem:[#allocation2 + $0x1c] sm:$0xf]
    %v41 = vld [vmem:[#allocation2 + $0x20] sm:$0xf]
    %v42 = vld [vmem:[#allocation2 + $0x24] sm:$0xf]
    %v43 = vld [vmem:[#allocation2 + $0x28] sm:$0xf]
    %v44 = vld [vmem:[#allocation2 + $0x2c] sm:$0xf]
    %v45 = vld [vmem:[#allocation2 + $0x30] sm:$0xf]
    %v46 = vld [vmem:[#allocation2 + $0x34] sm:$0xf]
    %v47 = vld [vmem:[#allocation2 + $0x38] sm:$0xf]
    %v48 = vld [vmem:[#allocation2 + $0x3c] sm:$0xf]
    %v49 = vld [vmem:[#allocation2 + $0x40] sm:$0xf]
    %v50 = vld [vmem:[#allocation2 + $0x44] sm:$0xf]
    %v51 = vld [vmem:[#allocation2 + $0x48] sm:$0xf]
    %v52 = vld [vmem:[#allocation2 + $0x4c] sm:$0xf]
    %v53 = vld [vmem:[#allocation2 + $0x50] sm:$0xf]
    %v54 = vld [vmem:[#allocation2 + $0x54] sm:$0xf]
    %v55 = vld [vmem:[#allocation2 + $0x58] sm:$0xf]
    %v56 = vld [vmem:[#allocation2 + $0x5c] sm:$0xf]
    %v57 = vld [vmem:[#allocation2 + $0x60] sm:$0xf]
    %v58 = vld [vmem:[#allocation2 + $0x64] sm:$0xf]
    %v59 = vld [vmem:[#allocation2 + $0x68] sm:$0xf]
    %v60 = vld [vmem:[#allocation2 + $0x6c] sm:$0xf]
    %v61 = vld [vmem:[#allocation2 + $0x70] sm:$0xf]
    %v62 = vld [vmem:[#allocation2 + $0x74] sm:$0xf]
    %v63 = vld [vmem:[#allocation2 + $0x78] sm:$0xf]
    %v64 = vld [vmem:[#allocation2 + $0x7c] sm:$0xf]
    %v65 = vld [vmem:[#allocation2 + $0x80] sm:$0xf]
    %v66 = vld [vmem:[#allocation2 + $0x84] sm:$0xf]
    %v67 = vld [vmem:[#allocation2 + $0x88] sm:$0xf]
    %v68 = vld [vmem:[#allocation2 + $0x8c] sm:$0xf]
    %v69 = vld [vmem:[#allocation2 + $0x90] sm:$0xf]
    %v70 = vld [vmem:[#allocation2 + $0x94] sm:$0xf]
    %v71 = vld [vmem:[#allocation2 + $0x98] sm:$0xf]
    %v72 = vld [vmem:[#allocation2 + $0x9c] sm:$0xf]
    %v73 = vld [vmem:[#allocation2 + $0xa0] sm:$0xf]
    %v74 = vld [vmem:[#allocation2 + $0xa4] sm:$0xf]
    %v75 = vld [vmem:[#allocation2 + $0xa8] sm:$0xf]
    %v76 = vld [vmem:[#allocation2 + $0xac] sm:$0xf]
    %v77 = vld [vmem:[#allocation2 + $0xb0] sm:$0xf]
    %v78 = vld [vmem:[#allocation2 + $0xb4] sm:$0xf]
    %v79 = vld [vmem:[#allocation2 + $0xb8] sm:$0xf]
    %v80 = vld [vmem:[#allocation2 + $0xbc] sm:$0xf]
    %v81 = vld [vmem:[#allocation2 + $0xc0] sm:$0xf]
    %v82 = vld [vmem:[#allocation2 + $0xc4] sm:$0xf]
    %v83 = vld [vmem:[#allocation2 + $0xc8] sm:$0xf]
    %v84 = vld [vmem:[#allocation2 + $0xcc] sm:$0xf]
    %v85 = vld [vmem:[#allocation2 + $0xd0] sm:$0xf]
    %v86 = vld [vmem:[#allocation2 + $0xd4] sm:$0xf]
    %v87 = vld [vmem:[#allocation2 + $0xd8] sm:$0xf]
    %v88 = vld [vmem:[#allocation2 + $0xdc] sm:$0xf]
    %v89 = vld [vmem:[#allocation2 + $0xe0] sm:$0xf]
    %v90 = vld [vmem:[#allocation2 + $0xe4] sm:$0xf]
    %v91 = vld [vmem:[#allocation2 + $0xe8] sm:$0xf]
    %v92 = vld [vmem:[#allocation2 + $0xec] sm:$0xf]
    %v93 = vld [vmem:[#allocation2 + $0xf0] sm:$0xf]
    %v94 = vld [vmem:[#allocation2 + $0xf4] sm:$0xf]
    %v95 = vld [vmem:[#allocation2 + $0xf8] sm:$0xf]
    %v96 = vld [vmem:[#allocation2 + $0xfc] sm:$0xf]
    %v97 = vld [vmem:[#allocation2 + $0x100] sm:$0xf]
    %v98 = vld [vmem:[#allocation2 + $0x104] sm:$0xf]
    %v99 = vld [vmem:[#allocation2 + $0x108] sm:$0xf]
    %v100 = vld [vmem:[#allocation2 + $0x10c] sm:$0xf]
    %v101 = vld [vmem:[#allocation2 + $0x110] sm:$0xf]
    %v102 = vld [vmem:[#allocation2 + $0x114] sm:$0xf]
    %v103 = vld [vmem:[#allocation2 + $0x118] sm:$0xf]
    %v104 = vld [vmem:[#allocation2 + $0x11c] sm:$0xf]
    %v105 = vld [vmem:[#allocation2 + $0x120] sm:$0xf]
    %v106 = vld [vmem:[#allocation2 + $0x124] sm:$0xf]
    %v107 = vld [vmem:[#allocation2 + $0x128] sm:$0xf]
    %v108 = vld [vmem:[#allocation2 + $0x12c] sm:$0xf]
    %v109 = vld [vmem:[#allocation2 + $0x130] sm:$0xf]
    %v110 = vld [vmem:[#allocation2 + $0x134] sm:$0xf]
    %v111 = vld [vmem:[#allocation2 + $0x138] sm:$0xf]
    %v112 = vld [vmem:[#allocation2 + $0x13c] sm:$0xf]
    %v113 = vld [vmem:[#allocation2 + $0x140] sm:$0xf]
    %v114 = vld [vmem:[#allocation2 + $0x144] sm:$0xf]
    %v115 = vld [vmem:[#allocation2 + $0x148] sm:$0xf]
    %v116 = vld [vmem:[#allocation2 + $0x14c] sm:$0xf]
    %v117 = vld [vmem:[#allocation2 + $0x150] sm:$0xf]
    %v118 = vld [vmem:[#allocation2 + $0x154] sm:$0xf]
    %v119 = vld [vmem:[#allocation2 + $0x158] sm:$0xf]
    %v120 = vld [vmem:[#allocation2 + $0x15c] sm:$0xf]
    %v121 = vld [vmem:[#allocation2 + $0x160] sm:$0xf]
    %v122 = vld [vmem:[#allocation2 + $0x164] sm:$0xf]
    %v123 = vld [vmem:[#allocation2 + $0x168] sm:$0xf]
    %v124 = vld [vmem:[#allocation2 + $0x16c] sm:$0xf]
    %v125 = vld [vmem:[#allocation2 + $0x170] sm:$0xf]
    %v126 = vld [vmem:[#allocation2 + $0x174] sm:$0xf]
    %v127 = vld [vmem:[#allocation2 + $0x178] sm:$0xf]
    %v128 = vld [vmem:[#allocation2 + $0x17c] sm:$0xf]
    %v129 = vld [vmem:[#allocation2 + $0x180] sm:$0xf]
    %v130 = vld [vmem:[#allocation2 + $0x184] sm:$0xf]
    %v131 = vld [vmem:[#allocation2 + $0x188] sm:$0xf]
    %v132 = vld [vmem:[#allocation2 + $0x18c] sm:$0xf]
    %v133 = vld [vmem:[#allocation2 + $0x190] sm:$0xf]
    %v134 = vld [vmem:[#allocation2 + $0x194] sm:$0xf]
    %v135 = vld [vmem:[#allocation2 + $0x198] sm:$0xf]
    %v136 = vld [vmem:[#allocation2 + $0x19c] sm:$0xf]
    %v137 = vld [vmem:[#allocation2 + $0x1a0] sm:$0xf]
    %v138 = vld [vmem:[#allocation2 + $0x1a4] sm:$0xf]
    %v139 = vld [vmem:[#allocation2 + $0x1a8] sm:$0xf]
    %v140 = vld [vmem:[#allocation2 + $0x1ac] sm:$0xf]
    %v141 = vld [vmem:[#allocation2 + $0x1b0] sm:$0xf]
    %v142 = vld [vmem:[#allocation2 + $0x1b4] sm:$0xf]
    %v143 = vld [vmem:[#allocation2 + $0x1b8] sm:$0xf]
    %v144 = vld [vmem:[#allocation2 + $0x1bc] sm:$0xf]
    %v145 = vld [vmem:[#allocation2 + $0x1c0] sm:$0xf]
    %v146 = vld [vmem:[#allocation2 + $0x1c4] sm:$0xf]
    %v147 = vld [vmem:[#allocation2 + $0x1c8] sm:$0xf]
    %v148 = vld [vmem:[#allocation2 + $0x1cc] sm:$0xf]
    %v149 = vld [vmem:[#allocation2 + $0x1d0] sm:$0xf]
    %v150 = vld [vmem:[#allocation2 + $0x1d4] sm:$0xf]
    %v151 = vld [vmem:[#allocation2 + $0x1d8] sm:$0xf]
    %v152 = vld [vmem:[#allocation2 + $0x1dc] sm:$0xf]
    %v153 = vld [vmem:[#allocation2 + $0x1e0] sm:$0xf]
    %v154 = vld [vmem:[#allocation2 + $0x1e4] sm:$0xf]
    %v155 = vld [vmem:[#allocation2 + $0x1e8] sm:$0xf]
    %v156 = vld [vmem:[#allocation2 + $0x1ec] sm:$0xf]
    %v157 = vld [vmem:[#allocation2 + $0x1f0] sm:$0xf]
    %v158 = vld [vmem:[#allocation2 + $0x1f4] sm:$0xf]
    %v159 = vld [vmem:[#allocation2 + $0x1f8] sm:$0xf]
    %v160 = vld [vmem:[#allocation2 + $0x1fc] sm:$0xf]
    %v161 = vld [vmem:[#allocation2 + $0x200] sm:$0xf]
    %v162 = vld [vmem:[#allocation2 + $0x204] sm:$0xf]
    %v163 = vld [vmem:[#allocation2 + $0x208] sm:$0xf]
    %v164 = vld [vmem:[#allocation2 + $0x20c] sm:$0xf]
    %v165 = vld [vmem:[#allocation2 + $0x210] sm:$0xf]
    %v166 = vld [vmem:[#allocation2 + $0x214] sm:$0xf]
    %v167 = vld [vmem:[#allocation2 + $0x218] sm:$0xf]
    %v168 = vld [vmem:[#allocation2 + $0x21c] sm:$0xf]
    %v169 = vld [vmem:[#allocation2 + $0x220] sm:$0xf]
    %v170 = vld [vmem:[#allocation2 + $0x224] sm:$0xf]
    %v171 = vld [vmem:[#allocation2 + $0x228] sm:$0xf]
    %v172 = vld [vmem:[#allocation2 + $0x22c] sm:$0xf]
    %v173 = vld [vmem:[#allocation2 + $0x230] sm:$0xf]
    %v174 = vld [vmem:[#allocation2 + $0x234] sm:$0xf]
    %v175 = vld [vmem:[#allocation2 + $0x238] sm:$0xf]
    %v176 = vld [vmem:[#allocation2 + $0x23c] sm:$0xf]
    %v177 = vld [vmem:[#allocation2 + $0x240] sm:$0xf]
    %v178 = vld [vmem:[#allocation2 + $0x244] sm:$0xf]
    %v179 = vld [vmem:[#allocation2 + $0x248] sm:$0xf]
    %v180 = vld [vmem:[#allocation2 + $0x24c] sm:$0xf]
    %v181 = vld [vmem:[#allocation2 + $0x250] sm:$0xf]
    %v182 = vld [vmem:[#allocation2 + $0x254] sm:$0xf]
    %v183 = vld [vmem:[#allocation2 + $0x258] sm:$0xf]
    %v184 = vld [vmem:[#allocation2 + $0x25c] sm:$0xf]
    %v185 = vld [vmem:[#allocation2 + $0x260] sm:$0xf]
    %v186 = vld [vmem:[#allocation2 + $0x264] sm:$0xf]
    %v187 = vld [vmem:[#allocation2 + $0x268] sm:$0xf]
    %v188 = vld [vmem:[#allocation2 + $0x26c] sm:$0xf]
    %v189 = vld [vmem:[#allocation2 + $0x270] sm:$0xf]
    %v190 = vld [vmem:[#allocation2 + $0x274] sm:$0xf]
    %v191 = vld [vmem:[#allocation2 + $0x278] sm:$0xf]
    %v192 = vld [vmem:[#allocation2 + $0x27c] sm:$0xf]
    %v193 = vld [vmem:[#allocation2 + $0x280] sm:$0xf]
    %v194 = vld [vmem:[#allocation2 + $0x284] sm:$0xf]
    %v195 = vld [vmem:[#allocation2 + $0x288] sm:$0xf]
    %v196 = vld [vmem:[#allocation2 + $0x28c] sm:$0xf]
    %v197 = vld [vmem:[#allocation2 + $0x290] sm:$0xf]
    %v198 = vld [vmem:[#allocation2 + $0x294] sm:$0xf]
    %v199 = vld [vmem:[#allocation2 + $0x298] sm:$0xf]
    %v200 = vld [vmem:[#allocation2 + $0x29c] sm:$0xf]
    %v201 = vld [vmem:[#allocation2 + $0x2a0] sm:$0xf]
    %v202 = vld [vmem:[#allocation2 + $0x2a4] sm:$0xf]
    %v203 = vld [vmem:[#allocation2 + $0x2a8] sm:$0xf]
    %v204 = vld [vmem:[#allocation2 + $0x2ac] sm:$0xf]
    %v205 = vld [vmem:[#allocation2 + $0x2b0] sm:$0xf]
    %v206 = vld [vmem:[#allocation2 + $0x2b4] sm:$0xf]
    %v207 = vld [vmem:[#allocation2 + $0x2b8] sm:$0xf]
    %v208 = vld [vmem:[#allocation2 + $0x2bc] sm:$0xf]
    %v209 = vld [vmem:[#allocation2 + $0x2c0] sm:$0xf]
    %v210 = vld [vmem:[#allocation2 + $0x2c4] sm:$0xf]
    %v211 = vld [vmem:[#allocation2 + $0x2c8] sm:$0xf]
    %v212 = vld [vmem:[#allocation2 + $0x2cc] sm:$0xf]
    %v213 = vld [vmem:[#allocation2 + $0x2d0] sm:$0xf]
    %v214 = vld [vmem:[#allocation2 + $0x2d4] sm:$0xf]
    %v215 = vld [vmem:[#allocation2 + $0x2d8] sm:$0xf]
    %v216 = vld [vmem:[#allocation2 + $0x2dc] sm:$0xf]
    %v217 = vld [vmem:[#allocation2 + $0x2e0] sm:$0xf]
    %v218 = vld [vmem:[#allocation2 + $0x2e4] sm:$0xf]
    %v219 = vld [vmem:[#allocation2 + $0x2e8] sm:$0xf]
    %v220 = vld [vmem:[#allocation2 + $0x2ec] sm:$0xf]
    %v221 = vld [vmem:[#allocation2 + $0x2f0] sm:$0xf]
    %v222 = vld [vmem:[#allocation2 + $0x2f4] sm:$0xf]
    %v223 = vld [vmem:[#allocation2 + $0x2f8] sm:$0xf]
    %v224 = vld [vmem:[#allocation2 + $0x2fc] sm:$0xf]
    %v225 = vld [vmem:[#allocation2 + $0x300] sm:$0xf]
    %v226 = vld [vmem:[#allocation2 + $0x304] sm:$0xf]
    %v227 = vld [vmem:[#allocation2 + $0x308] sm:$0xf]
    %v228 = vld [vmem:[#allocation2 + $0x30c] sm:$0xf]
    %v229 = vld [vmem:[#allocation2 + $0x310] sm:$0xf]
    %v230 = vld [vmem:[#allocation2 + $0x314] sm:$0xf]
    %v231 = vld [vmem:[#allocation2 + $0x318] sm:$0xf]
    %v232 = vld [vmem:[#allocation2 + $0x31c] sm:$0xf]
    %v233 = vld [vmem:[#allocation2 + $0x320] sm:$0xf]
    %v234 = vld [vmem:[#allocation2 + $0x324] sm:$0xf]
    %v235 = vld [vmem:[#allocation2 + $0x328] sm:$0xf]
    %v236 = vld [vmem:[#allocation2 + $0x32c] sm:$0xf]
    %v237 = vld [vmem:[#allocation2 + $0x330] sm:$0xf]
    %v238 = vld [vmem:[#allocation2 + $0x334] sm:$0xf]
    %v239 = vld [vmem:[#allocation2 + $0x338] sm:$0xf]
    %v240 = vld [vmem:[#allocation2 + $0x33c] sm:$0xf]
    %v241 = vld [vmem:[#allocation2 + $0x340] sm:$0xf]
    %v242 = vld [vmem:[#allocation2 + $0x344] sm:$0xf]
    %v243 = vld [vmem:[#allocation2 + $0x348] sm:$0xf]
    %v244 = vld [vmem:[#allocation2 + $0x34c] sm:$0xf]
    %v245 = vld [vmem:[#allocation2 + $0x350] sm:$0xf]
    %v246 = vld [vmem:[#allocation2 + $0x354] sm:$0xf]
    %v247 = vld [vmem:[#allocation2 + $0x358] sm:$0xf]
    %v248 = vld [vmem:[#allocation2 + $0x35c] sm:$0xf]
    %v249 = vld [vmem:[#allocation2 + $0x360] sm:$0xf]
    %v250 = vld [vmem:[#allocation2 + $0x364] sm:$0xf]
    %v251 = vld [vmem:[#allocation2 + $0x368] sm:$0xf]
    %v252 = vld [vmem:[#allocation2 + $0x36c] sm:$0xf]
    %v253 = vld [vmem:[#allocation2 + $0x370] sm:$0xf]
    %v254 = vld [vmem:[#allocation2 + $0x374] sm:$0xf]
    %v255 = vld [vmem:[#allocation2 + $0x378] sm:$0xf]
    %v256 = vld [vmem:[#allocation2 + $0x37c] sm:$0xf]
    %v257 = vld [vmem:[#allocation2 + $0x380] sm:$0xf]
    %v258 = vld [vmem:[#allocation2 + $0x384] sm:$0xf]
    %v259 = vld [vmem:[#allocation2 + $0x388] sm:$0xf]
    %v260 = vld [vmem:[#allocation2 + $0x38c] sm:$0xf]
    %v261 = vld [vmem:[#allocation2 + $0x390] sm:$0xf]
    %v262 = vld [vmem:[#allocation2 + $0x394] sm:$0xf]
    %v263 = vld [vmem:[#allocation2 + $0x398] sm:$0xf]
    %v264 = vld [vmem:[#allocation2 + $0x39c] sm:$0xf]
    %v265 = vld [vmem:[#allocation2 + $0x3a0] sm:$0xf]
    %v266 = vld [vmem:[#allocation2 + $0x3a4] sm:$0xf]
    %v267 = vld [vmem:[#allocation2 + $0x3a8] sm:$0xf]
    %v268 = vld [vmem:[#allocation2 + $0x3ac] sm:$0xf]
    %v269 = vld [vmem:[#allocation2 + $0x3b0] sm:$0xf]
    %v270 = vld [vmem:[#allocation2 + $0x3b4] sm:$0xf]
    %v271 = vld [vmem:[#allocation2 + $0x3b8] sm:$0xf]
    %v272 = vld [vmem:[#allocation2 + $0x3bc] sm:$0xf]
    %v273 = vld [vmem:[#allocation2 + $0x3c0] sm:$0xf]
    %v274 = vld [vmem:[#allocation2 + $0x3c4] sm:$0xf]
    %v275 = vld [vmem:[#allocation2 + $0x3c8] sm:$0xf]
    %v276 = vld [vmem:[#allocation2 + $0x3cc] sm:$0xf]
    %v277 = vld [vmem:[#allocation2 + $0x3d0] sm:$0xf]
    %v278 = vld [vmem:[#allocation2 + $0x3d4] sm:$0xf]
    %v279 = vld [vmem:[#allocation2 + $0x3d8] sm:$0xf]
    %v280 = vld [vmem:[#allocation2 + $0x3dc] sm:$0xf]
    %v281 = vld [vmem:[#allocation2 + $0x3e0] sm:$0xf]
    %v282 = vld [vmem:[#allocation2 + $0x3e4] sm:$0xf]
    %v283 = vld [vmem:[#allocation2 + $0x3e8] sm:$0xf]
    %v284 = vld [vmem:[#allocation2 + $0x3ec] sm:$0xf]
    %v285 = vld [vmem:[#allocation2 + $0x3f0] sm:$0xf]
    %v286 = vld [vmem:[#allocation2 + $0x3f4] sm:$0xf]
    %v287 = vld [vmem:[#allocation2 + $0x3f8] sm:$0xf]
    %v288 = vld [vmem:[#allocation2 + $0x3fc] sm:$0xf]
    %v289 = vld [vmem:[%s2] sm:$0x1]
    %v291 = vperm.slane %v289, 0
    %294 = vst [vmem:[#allocation1] ss:$9 sm:$0xff] %v31
    %v295 = vld [vmem:[#allocation1] sm:$0xff]
    %v296 = vld [vmem:[#allocation1 + $0x9] sm:$0xff]
    %v297 = vld [vmem:[#allocation1 + $0x12] sm:$0xff]
    %v298 = vld [vmem:[#allocation1 + $0x1b] sm:$0xff]
    %v299 = vld [vmem:[#allocation1 + $0x24] sm:$0xff]
    %v300 = vld [vmem:[#allocation1 + $0x2d] sm:$0xff]
    %v301 = vld [vmem:[#allocation1 + $0x36] sm:$0xff]
    %v302 = vld [vmem:[#allocation1 + $0x3f] sm:$0xff]
    %304 = vst [vmem:[#allocation1] ss:$9 sm:$0xff] %v32
    %v305 = vld [vmem:[#allocation1] sm:$0xff]
    %v306 = vld [vmem:[#allocation1 + $0x9] sm:$0xff]
    %v307 = vld [vmem:[#allocation1 + $0x12] sm:$0xff]
    %v308 = vld [vmem:[#allocation1 + $0x1b] sm:$0xff]
    %v309 = vld [vmem:[#allocation1 + $0x24] sm:$0xff]
    %v310 = vld [vmem:[#allocation1 + $0x2d] sm:$0xff]
    %v311 = vld [vmem:[#allocation1 + $0x36] sm:$0xff]
    %v312 = vld [vmem:[#allocation1 + $0x3f] sm:$0xff]
    %v585 = vunpack.c.l.b16 %v33
    %v586 = vunpack.c.l.b16 %v34
    %v587 = vunpack.c.l.b16 %v35
    %v588 = vunpack.c.l.b16 %v36
    %v589 = vunpack.c.l.b16 %v37
    %v590 = vunpack.c.l.b16 %v38
    %v591 = vunpack.c.l.b16 %v39
    %v592 = vunpack.c.l.b16 %v40
    %v593 = vunpack.c.l.b16 %v41
    %v594 = vunpack.c.l.b16 %v42
    %v595 = vunpack.c.l.b16 %v43
    %v596 = vunpack.c.l.b16 %v44
    %v597 = vunpack.c.l.b16 %v45
    %v598 = vunpack.c.l.b16 %v46
    %v599 = vunpack.c.l.b16 %v47
    %v600 = vunpack.c.l.b16 %v48
    %v601 = vunpack.c.l.b16 %v49
    %v602 = vunpack.c.l.b16 %v50
    %v603 = vunpack.c.l.b16 %v51
    %v604 = vunpack.c.l.b16 %v52
    %v605 = vunpack.c.l.b16 %v53
    %v606 = vunpack.c.l.b16 %v54
    %v607 = vunpack.c.l.b16 %v55
    %v608 = vunpack.c.l.b16 %v56
    %v609 = vunpack.c.l.b16 %v57
    %v610 = vunpack.c.l.b16 %v58
    %v611 = vunpack.c.l.b16 %v59
    %v612 = vunpack.c.l.b16 %v60
    %v613 = vunpack.c.l.b16 %v61
    %v614 = vunpack.c.l.b16 %v62
    %v615 = vunpack.c.l.b16 %v63
    %v616 = vunpack.c.l.b16 %v64
    %v617 = vunpack.c.l.b16 %v65
    %v618 = vunpack.c.l.b16 %v66
    %v619 = vunpack.c.l.b16 %v67
    %v620 = vunpack.c.l.b16 %v68
    %v621 = vunpack.c.l.b16 %v69
    %v622 = vunpack.c.l.b16 %v70
    %v623 = vunpack.c.l.b16 %v71
    %v624 = vunpack.c.l.b16 %v72
    %v625 = vunpack.c.l.b16 %v73
    %v626 = vunpack.c.l.b16 %v74
    %v627 = vunpack.c.l.b16 %v75
    %v628 = vunpack.c.l.b16 %v76
    %v629 = vunpack.c.l.b16 %v77
    %v630 = vunpack.c.l.b16 %v78
    %v631 = vunpack.c.l.b16 %v79
    %v632 = vunpack.c.l.b16 %v80
    %v633 = vunpack.c.l.b16 %v81
    %v634 = vunpack.c.l.b16 %v82
    %v635 = vunpack.c.l.b16 %v83
    %v636 = vunpack.c.l.b16 %v84
    %v637 = vunpack.c.l.b16 %v85
    %v638 = vunpack.c.l.b16 %v86
    %v639 = vunpack.c.l.b16 %v87
    %v640 = vunpack.c.l.b16 %v88
    %v641 = vunpack.c.l.b16 %v89
    %v642 = vunpack.c.l.b16 %v90
    %v643 = vunpack.c.l.b16 %v91
    %v644 = vunpack.c.l.b16 %v92
    %v645 = vunpack.c.l.b16 %v93
    %v646 = vunpack.c.l.b16 %v94
    %v647 = vunpack.c.l.b16 %v95
    %v648 = vunpack.c.l.b16 %v96
    %v649 = vunpack.c.l.b16 %v97
    %v650 = vunpack.c.l.b16 %v98
    %v651 = vunpack.c.l.b16 %v99
    %v652 = vunpack.c.l.b16 %v100
    %v653 = vunpack.c.l.b16 %v101
    %v654 = vunpack.c.l.b16 %v102
    %v655 = vunpack.c.l.b16 %v103
    %v656 = vunpack.c.l.b16 %v104
    %v657 = vunpack.c.l.b16 %v105
    %v658 = vunpack.c.l.b16 %v106
    %v659 = vunpack.c.l.b16 %v107
    %v660 = vunpack.c.l.b16 %v108
    %v661 = vunpack.c.l.b16 %v109
    %v662 = vunpack.c.l.b16 %v110
    %v663 = vunpack.c.l.b16 %v111
    %v664 = vunpack.c.l.b16 %v112
    %v665 = vunpack.c.l.b16 %v113
    %v666 = vunpack.c.l.b16 %v114
    %v667 = vunpack.c.l.b16 %v115
    %v668 = vunpack.c.l.b16 %v116
    %v669 = vunpack.c.l.b16 %v117
    %v670 = vunpack.c.l.b16 %v118
    %v671 = vunpack.c.l.b16 %v119
    %v672 = vunpack.c.l.b16 %v120
    %v673 = vunpack.c.l.b16 %v121
    %v674 = vunpack.c.l.b16 %v122
    %v675 = vunpack.c.l.b16 %v123
    %v676 = vunpack.c.l.b16 %v124
    %v677 = vunpack.c.l.b16 %v125
    %v678 = vunpack.c.l.b16 %v126
    %v679 = vunpack.c.l.b16 %v127
    %v680 = vunpack.c.l.b16 %v128
    %v681 = vunpack.c.l.b16 %v129
    %v682 = vunpack.c.l.b16 %v130
    %v683 = vunpack.c.l.b16 %v131
    %v684 = vunpack.c.l.b16 %v132
    %v685 = vunpack.c.l.b16 %v133
    %v686 = vunpack.c.l.b16 %v134
    %v687 = vunpack.c.l.b16 %v135
    %v688 = vunpack.c.l.b16 %v136
    %v689 = vunpack.c.l.b16 %v137
    %v690 = vunpack.c.l.b16 %v138
    %v691 = vunpack.c.l.b16 %v139
    %v692 = vunpack.c.l.b16 %v140
    %v693 = vunpack.c.l.b16 %v141
    %v694 = vunpack.c.l.b16 %v142
    %v695 = vunpack.c.l.b16 %v143
    %v696 = vunpack.c.l.b16 %v144
    %v697 = vunpack.c.l.b16 %v145
    %v698 = vunpack.c.l.b16 %v146
    %v699 = vunpack.c.l.b16 %v147
    %v700 = vunpack.c.l.b16 %v148
    %v701 = vunpack.c.l.b16 %v149
    %v702 = vunpack.c.l.b16 %v150
    %v703 = vunpack.c.l.b16 %v151
    %v704 = vunpack.c.l.b16 %v152
    %v705 = vunpack.c.l.b16 %v153
    %v706 = vunpack.c.l.b16 %v154
    %v707 = vunpack.c.l.b16 %v155
    %v708 = vunpack.c.l.b16 %v156
    %v709 = vunpack.c.l.b16 %v157
    %v710 = vunpack.c.l.b16 %v158
    %v711 = vunpack.c.l.b16 %v159
    %v712 = vunpack.c.l.b16 %v160
    %v713 = vunpack.c.l.b16 %v161
    %v714 = vunpack.c.l.b16 %v162
    %v715 = vunpack.c.l.b16 %v163
    %v716 = vunpack.c.l.b16 %v164
    %v717 = vunpack.c.l.b16 %v165
    %v718 = vunpack.c.l.b16 %v166
    %v719 = vunpack.c.l.b16 %v167
    %v720 = vunpack.c.l.b16 %v168
    %v721 = vunpack.c.l.b16 %v169
    %v722 = vunpack.c.l.b16 %v170
    %v723 = vunpack.c.l.b16 %v171
    %v724 = vunpack.c.l.b16 %v172
    %v725 = vunpack.c.l.b16 %v173
    %v726 = vunpack.c.l.b16 %v174
    %v727 = vunpack.c.l.b16 %v175
    %v728 = vunpack.c.l.b16 %v176
    %v729 = vunpack.c.l.b16 %v177
    %v730 = vunpack.c.l.b16 %v178
    %v731 = vunpack.c.l.b16 %v179
    %v732 = vunpack.c.l.b16 %v180
    %v733 = vunpack.c.l.b16 %v181
    %v734 = vunpack.c.l.b16 %v182
    %v735 = vunpack.c.l.b16 %v183
    %v736 = vunpack.c.l.b16 %v184
    %v737 = vunpack.c.l.b16 %v185
    %v738 = vunpack.c.l.b16 %v186
    %v739 = vunpack.c.l.b16 %v187
    %v740 = vunpack.c.l.b16 %v188
    %v741 = vunpack.c.l.b16 %v189
    %v742 = vunpack.c.l.b16 %v190
    %v743 = vunpack.c.l.b16 %v191
    %v744 = vunpack.c.l.b16 %v192
    %v745 = vunpack.c.l.b16 %v193
    %v746 = vunpack.c.l.b16 %v194
    %v747 = vunpack.c.l.b16 %v195
    %v748 = vunpack.c.l.b16 %v196
    %v749 = vunpack.c.l.b16 %v197
    %v750 = vunpack.c.l.b16 %v198
    %v751 = vunpack.c.l.b16 %v199
    %v752 = vunpack.c.l.b16 %v200
    %v753 = vunpack.c.l.b16 %v201
    %v754 = vunpack.c.l.b16 %v202
    %v755 = vunpack.c.l.b16 %v203
    %v756 = vunpack.c.l.b16 %v204
    %v757 = vunpack.c.l.b16 %v205
    %v758 = vunpack.c.l.b16 %v206
    %v759 = vunpack.c.l.b16 %v207
    %v760 = vunpack.c.l.b16 %v208
    %v761 = vunpack.c.l.b16 %v209
    %v762 = vunpack.c.l.b16 %v210
    %v763 = vunpack.c.l.b16 %v211
    %v764 = vunpack.c.l.b16 %v212
    %v765 = vunpack.c.l.b16 %v213
    %v766 = vunpack.c.l.b16 %v214
    %v767 = vunpack.c.l.b16 %v215
    %v768 = vunpack.c.l.b16 %v216
    %v769 = vunpack.c.l.b16 %v217
    %v770 = vunpack.c.l.b16 %v218
    %v771 = vunpack.c.l.b16 %v219
    %v772 = vunpack.c.l.b16 %v220
    %v773 = vunpack.c.l.b16 %v221
    %v774 = vunpack.c.l.b16 %v222
    %v775 = vunpack.c.l.b16 %v223
    %v776 = vunpack.c.l.b16 %v224
    %v777 = vunpack.c.l.b16 %v225
    %v778 = vunpack.c.l.b16 %v226
    %v779 = vunpack.c.l.b16 %v227
    %v780 = vunpack.c.l.b16 %v228
    %v781 = vunpack.c.l.b16 %v229
    %v782 = vunpack.c.l.b16 %v230
    %v783 = vunpack.c.l.b16 %v231
    %v784 = vunpack.c.l.b16 %v232
    %v785 = vunpack.c.l.b16 %v233
    %v786 = vunpack.c.l.b16 %v234
    %v787 = vunpack.c.l.b16 %v235
    %v788 = vunpack.c.l.b16 %v236
    %v789 = vunpack.c.l.b16 %v237
    %v790 = vunpack.c.l.b16 %v238
    %v791 = vunpack.c.l.b16 %v239
    %v792 = vunpack.c.l.b16 %v240
    %v793 = vunpack.c.l.b16 %v241
    %v794 = vunpack.c.l.b16 %v242
    %v795 = vunpack.c.l.b16 %v243
    %v796 = vunpack.c.l.b16 %v244
    %v797 = vunpack.c.l.b16 %v245
    %v798 = vunpack.c.l.b16 %v246
    %v799 = vunpack.c.l.b16 %v247
    %v800 = vunpack.c.l.b16 %v248
    %v801 = vunpack.c.l.b16 %v249
    %v802 = vunpack.c.l.b16 %v250
    %v803 = vunpack.c.l.b16 %v251
    %v804 = vunpack.c.l.b16 %v252
    %v805 = vunpack.c.l.b16 %v253
    %v806 = vunpack.c.l.b16 %v254
    %v807 = vunpack.c.l.b16 %v255
    %v808 = vunpack.c.l.b16 %v256
    %v809 = vunpack.c.l.b16 %v257
    %v810 = vunpack.c.l.b16 %v258
    %v811 = vunpack.c.l.b16 %v259
    %v812 = vunpack.c.l.b16 %v260
    %v813 = vunpack.c.l.b16 %v261
    %v814 = vunpack.c.l.b16 %v262
    %v815 = vunpack.c.l.b16 %v263
    %v816 = vunpack.c.l.b16 %v264
    %v817 = vunpack.c.l.b16 %v265
    %v818 = vunpack.c.l.b16 %v266
    %v819 = vunpack.c.l.b16 %v267
    %v820 = vunpack.c.l.b16 %v268
    %v821 = vunpack.c.l.b16 %v269
    %v822 = vunpack.c.l.b16 %v270
    %v823 = vunpack.c.l.b16 %v271
    %v824 = vunpack.c.l.b16 %v272
    %v825 = vunpack.c.l.b16 %v273
    %v826 = vunpack.c.l.b16 %v274
    %v827 = vunpack.c.l.b16 %v275
    %v828 = vunpack.c.l.b16 %v276
    %v829 = vunpack.c.l.b16 %v277
    %v830 = vunpack.c.l.b16 %v278
    %v831 = vunpack.c.l.b16 %v279
    %v832 = vunpack.c.l.b16 %v280
    %v833 = vunpack.c.l.b16 %v281
    %v834 = vunpack.c.l.b16 %v282
    %v835 = vunpack.c.l.b16 %v283
    %v836 = vunpack.c.l.b16 %v284
    %v837 = vunpack.c.l.b16 %v285
    %v838 = vunpack.c.l.b16 %v286
    %v839 = vunpack.c.l.b16 %v287
    %v840 = vunpack.c.l.b16 %v288
    %v841 = vpack.c.b16 %v586, %v585
    %v842 = vpack.c.b16 %v588, %v587
    %v843 = vpack.c.b16 %v590, %v589
    %v844 = vpack.c.b16 %v592, %v591
    %v845 = vpack.c.b16 %v594, %v593
    %v846 = vpack.c.b16 %v596, %v595
    %v847 = vpack.c.b16 %v598, %v597
    %v848 = vpack.c.b16 %v600, %v599
    %v849 = vpack.c.b16 %v602, %v601
    %v850 = vpack.c.b16 %v604, %v603
    %v851 = vpack.c.b16 %v606, %v605
    %v852 = vpack.c.b16 %v608, %v607
    %v853 = vpack.c.b16 %v610, %v609
    %v854 = vpack.c.b16 %v612, %v611
    %v855 = vpack.c.b16 %v614, %v613
    %v856 = vpack.c.b16 %v616, %v615
    %v857 = vpack.c.b16 %v618, %v617
    %v858 = vpack.c.b16 %v620, %v619
    %v859 = vpack.c.b16 %v622, %v621
    %v860 = vpack.c.b16 %v624, %v623
    %v861 = vpack.c.b16 %v626, %v625
    %v862 = vpack.c.b16 %v628, %v627
    %v863 = vpack.c.b16 %v630, %v629
    %v864 = vpack.c.b16 %v632, %v631
    %v865 = vpack.c.b16 %v634, %v633
    %v866 = vpack.c.b16 %v636, %v635
    %v867 = vpack.c.b16 %v638, %v637
    %v868 = vpack.c.b16 %v640, %v639
    %v869 = vpack.c.b16 %v642, %v641
    %v870 = vpack.c.b16 %v644, %v643
    %v871 = vpack.c.b16 %v646, %v645
    %v872 = vpack.c.b16 %v648, %v647
    %v873 = vpack.c.b16 %v650, %v649
    %v874 = vpack.c.b16 %v652, %v651
    %v875 = vpack.c.b16 %v654, %v653
    %v876 = vpack.c.b16 %v656, %v655
    %v877 = vpack.c.b16 %v658, %v657
    %v878 = vpack.c.b16 %v660, %v659
    %v879 = vpack.c.b16 %v662, %v661
    %v880 = vpack.c.b16 %v664, %v663
    %v881 = vpack.c.b16 %v666, %v665
    %v882 = vpack.c.b16 %v668, %v667
    %v883 = vpack.c.b16 %v670, %v669
    %v884 = vpack.c.b16 %v672, %v671
    %v885 = vpack.c.b16 %v674, %v673
    %v886 = vpack.c.b16 %v676, %v675
    %v887 = vpack.c.b16 %v678, %v677
    %v888 = vpack.c.b16 %v680, %v679
    %v889 = vpack.c.b16 %v682, %v681
    %v890 = vpack.c.b16 %v684, %v683
    %v891 = vpack.c.b16 %v686, %v685
    %v892 = vpack.c.b16 %v688, %v687
    %v893 = vpack.c.b16 %v690, %v689
    %v894 = vpack.c.b16 %v692, %v691
    %v895 = vpack.c.b16 %v694, %v693
    %v896 = vpack.c.b16 %v696, %v695
    %v897 = vpack.c.b16 %v698, %v697
    %v898 = vpack.c.b16 %v700, %v699
    %v899 = vpack.c.b16 %v702, %v701
    %v900 = vpack.c.b16 %v704, %v703
    %v901 = vpack.c.b16 %v706, %v705
    %v902 = vpack.c.b16 %v708, %v707
    %v903 = vpack.c.b16 %v710, %v709
    %v904 = vpack.c.b16 %v712, %v711
    %v905 = vpack.c.b16 %v714, %v713
    %v906 = vpack.c.b16 %v716, %v715
    %v907 = vpack.c.b16 %v718, %v717
    %v908 = vpack.c.b16 %v720, %v719
    %v909 = vpack.c.b16 %v722, %v721
    %v910 = vpack.c.b16 %v724, %v723
    %v911 = vpack.c.b16 %v726, %v725
    %v912 = vpack.c.b16 %v728, %v727
    %v913 = vpack.c.b16 %v730, %v729
    %v914 = vpack.c.b16 %v732, %v731
    %v915 = vpack.c.b16 %v734, %v733
    %v916 = vpack.c.b16 %v736, %v735
    %v917 = vpack.c.b16 %v738, %v737
    %v918 = vpack.c.b16 %v740, %v739
    %v919 = vpack.c.b16 %v742, %v741
    %v920 = vpack.c.b16 %v744, %v743
    %v921 = vpack.c.b16 %v746, %v745
    %v922 = vpack.c.b16 %v748, %v747
    %v923 = vpack.c.b16 %v750, %v749
    %v924 = vpack.c.b16 %v752, %v751
    %v925 = vpack.c.b16 %v754, %v753
    %v926 = vpack.c.b16 %v756, %v755
    %v927 = vpack.c.b16 %v758, %v757
    %v928 = vpack.c.b16 %v760, %v759
    %v929 = vpack.c.b16 %v762, %v761
    %v930 = vpack.c.b16 %v764, %v763
    %v931 = vpack.c.b16 %v766, %v765
    %v932 = vpack.c.b16 %v768, %v767
    %v933 = vpack.c.b16 %v770, %v769
    %v934 = vpack.c.b16 %v772, %v771
    %v935 = vpack.c.b16 %v774, %v773
    %v936 = vpack.c.b16 %v776, %v775
    %v937 = vpack.c.b16 %v778, %v777
    %v938 = vpack.c.b16 %v780, %v779
    %v939 = vpack.c.b16 %v782, %v781
    %v940 = vpack.c.b16 %v784, %v783
    %v941 = vpack.c.b16 %v786, %v785
    %v942 = vpack.c.b16 %v788, %v787
    %v943 = vpack.c.b16 %v790, %v789
    %v944 = vpack.c.b16 %v792, %v791
    %v945 = vpack.c.b16 %v794, %v793
    %v946 = vpack.c.b16 %v796, %v795
    %v947 = vpack.c.b16 %v798, %v797
    %v948 = vpack.c.b16 %v800, %v799
    %v949 = vpack.c.b16 %v802, %v801
    %v950 = vpack.c.b16 %v804, %v803
    %v951 = vpack.c.b16 %v806, %v805
    %v952 = vpack.c.b16 %v808, %v807
    %v953 = vpack.c.b16 %v810, %v809
    %v954 = vpack.c.b16 %v812, %v811
    %v955 = vpack.c.b16 %v814, %v813
    %v956 = vpack.c.b16 %v816, %v815
    %v957 = vpack.c.b16 %v818, %v817
    %v958 = vpack.c.b16 %v820, %v819
    %v959 = vpack.c.b16 %v822, %v821
    %v960 = vpack.c.b16 %v824, %v823
    %v961 = vpack.c.b16 %v826, %v825
    %v962 = vpack.c.b16 %v828, %v827
    %v963 = vpack.c.b16 %v830, %v829
    %v964 = vpack.c.b16 %v832, %v831
    %v965 = vpack.c.b16 %v834, %v833
    %v966 = vpack.c.b16 %v836, %v835
    %v967 = vpack.c.b16 %v838, %v837
    %v968 = vpack.c.b16 %v840, %v839
    %1097 = vmatpush.bf16.msra.mxu0 %v848
    %1098 = vmatpush.bf16.msra.mxu0 %v847
    %1099 = vmatpush.bf16.msra.mxu0 %v846
    %1100 = vmatpush.bf16.msra.mxu0 %v845
    %1101 = vmatpush.bf16.msra.mxu0 %v844
    %1102 = vmatpush.bf16.msra.mxu0 %v843
    %1103 = vmatpush.bf16.msra.mxu0 %v842
    %1104 = vmatpush.bf16.msra.mxu0 %v841
    %1105 = vmatmul.bf16.gmra.mxu0 %v295
    %v1106 = vpop.f32.mrf.mxu0
    %v1107 = vadd.f32 %v291, %v1106
    %v1108 = vpop.f32.mrf.mxu0
    %1109 = vdwg.mxu0
    %1110 = vmatpush.bf16.msra.mxu0 %v856
    %1111 = vmatpush.bf16.msra.mxu0 %v855
    %1112 = vmatpush.bf16.msra.mxu0 %v854
    %1113 = vmatpush.bf16.msra.mxu0 %v853
    %1114 = vmatpush.bf16.msra.mxu0 %v852
    %1115 = vmatpush.bf16.msra.mxu0 %v851
    %1116 = vmatpush.bf16.msra.mxu0 %v850
    %1117 = vmatpush.bf16.msra.mxu0 %v849
    %1118 = vmatmul.bf16.gmra.mxu0 %v296
    %v1119 = vpop.f32.mrf.mxu0
    %v1120 = vadd.f32 %v1107, %v1119
    %v1121 = vpop.f32.mrf.mxu0
    %1122 = vdwg.mxu0
    %1123 = vmatpush.bf16.msra.mxu0 %v864
    %1124 = vmatpush.bf16.msra.mxu0 %v863
    %1125 = vmatpush.bf16.msra.mxu0 %v862
    %1126 = vmatpush.bf16.msra.mxu0 %v861
    %1127 = vmatpush.bf16.msra.mxu0 %v860
    %1128 = vmatpush.bf16.msra.mxu0 %v859
    %1129 = vmatpush.bf16.msra.mxu0 %v858
    %1130 = vmatpush.bf16.msra.mxu0 %v857
    %1131 = vmatmul.bf16.gmra.mxu0 %v297
    %v1132 = vpop.f32.mrf.mxu0
    %v1133 = vadd.f32 %v1120, %v1132
    %v1134 = vpop.f32.mrf.mxu0
    %1135 = vdwg.mxu0
    %1136 = vmatpush.bf16.msra.mxu0 %v872
    %1137 = vmatpush.bf16.msra.mxu0 %v871
    %1138 = vmatpush.bf16.msra.mxu0 %v870
    %1139 = vmatpush.bf16.msra.mxu0 %v869
    %1140 = vmatpush.bf16.msra.mxu0 %v868
    %1141 = vmatpush.bf16.msra.mxu0 %v867
    %1142 = vmatpush.bf16.msra.mxu0 %v866
    %1143 = vmatpush.bf16.msra.mxu0 %v865
    %1144 = vmatmul.bf16.gmra.mxu0 %v298
    %v1145 = vpop.f32.mrf.mxu0
    %v1146 = vadd.f32 %v1133, %v1145
    %v1147 = vpop.f32.mrf.mxu0
    %1148 = vdwg.mxu0
    %1149 = vmatpush.bf16.msra.mxu0 %v880
    %1150 = vmatpush.bf16.msra.mxu0 %v879
    %1151 = vmatpush.bf16.msra.mxu0 %v878
    %1152 = vmatpush.bf16.msra.mxu0 %v877
    %1153 = vmatpush.bf16.msra.mxu0 %v876
    %1154 = vmatpush.bf16.msra.mxu0 %v875
    %1155 = vmatpush.bf16.msra.mxu0 %v874
    %1156 = vmatpush.bf16.msra.mxu0 %v873
    %1157 = vmatmul.bf16.gmra.mxu0 %v299
    %v1158 = vpop.f32.mrf.mxu0
    %v1159 = vadd.f32 %v1146, %v1158
    %v1160 = vpop.f32.mrf.mxu0
    %1161 = vdwg.mxu0
    %1162 = vmatpush.bf16.msra.mxu0 %v888
    %1163 = vmatpush.bf16.msra.mxu0 %v887
    %1164 = vmatpush.bf16.msra.mxu0 %v886
    %1165 = vmatpush.bf16.msra.mxu0 %v885
    %1166 = vmatpush.bf16.msra.mxu0 %v884
    %1167 = vmatpush.bf16.msra.mxu0 %v883
    %1168 = vmatpush.bf16.msra.mxu0 %v882
    %1169 = vmatpush.bf16.msra.mxu0 %v881
    %1170 = vmatmul.bf16.gmra.mxu0 %v300
    %v1171 = vpop.f32.mrf.mxu0
    %v1172 = vadd.f32 %v1159, %v1171
    %v1173 = vpop.f32.mrf.mxu0
    %1174 = vdwg.mxu0
    %1175 = vmatpush.bf16.msra.mxu0 %v896
    %1176 = vmatpush.bf16.msra.mxu0 %v895
    %1177 = vmatpush.bf16.msra.mxu0 %v894
    %1178 = vmatpush.bf16.msra.mxu0 %v893
    %1179 = vmatpush.bf16.msra.mxu0 %v892
    %1180 = vmatpush.bf16.msra.mxu0 %v891
    %1181 = vmatpush.bf16.msra.mxu0 %v890
    %1182 = vmatpush.bf16.msra.mxu0 %v889
    %1183 = vmatmul.bf16.gmra.mxu0 %v301
    %v1184 = vpop.f32.mrf.mxu0
    %v1185 = vadd.f32 %v1172, %v1184
    %v1186 = vpop.f32.mrf.mxu0
    %1187 = vdwg.mxu0
    %1188 = vmatpush.bf16.msra.mxu0 %v904
    %1189 = vmatpush.bf16.msra.mxu0 %v903
    %1190 = vmatpush.bf16.msra.mxu0 %v902
    %1191 = vmatpush.bf16.msra.mxu0 %v901
    %1192 = vmatpush.bf16.msra.mxu0 %v900
    %1193 = vmatpush.bf16.msra.mxu0 %v899
    %1194 = vmatpush.bf16.msra.mxu0 %v898
    %1195 = vmatpush.bf16.msra.mxu0 %v897
    %1196 = vmatmul.bf16.gmra.mxu0 %v302
    %v1197 = vpop.f32.mrf.mxu0
    %v1198 = vadd.f32 %v1185, %v1197
    %v1199 = vpop.f32.mrf.mxu0
    %1200 = vdwg.mxu0
    %1201 = vmatpush.bf16.msra.mxu0 %v912
    %1202 = vmatpush.bf16.msra.mxu0 %v911
    %1203 = vmatpush.bf16.msra.mxu0 %v910
    %1204 = vmatpush.bf16.msra.mxu0 %v909
    %1205 = vmatpush.bf16.msra.mxu0 %v908
    %1206 = vmatpush.bf16.msra.mxu0 %v907
    %1207 = vmatpush.bf16.msra.mxu0 %v906
    %1208 = vmatpush.bf16.msra.mxu0 %v905
    %1209 = vmatmul.bf16.gmra.mxu0 %v305
    %v1210 = vpop.f32.mrf.mxu0
    %v1211 = vadd.f32 %v1198, %v1210
    %v1212 = vpop.f32.mrf.mxu0
    %1213 = vdwg.mxu0
    %1214 = vmatpush.bf16.msra.mxu0 %v920
    %1215 = vmatpush.bf16.msra.mxu0 %v919
    %1216 = vmatpush.bf16.msra.mxu0 %v918
    %1217 = vmatpush.bf16.msra.mxu0 %v917
    %1218 = vmatpush.bf16.msra.mxu0 %v916
    %1219 = vmatpush.bf16.msra.mxu0 %v915
    %1220 = vmatpush.bf16.msra.mxu0 %v914
    %1221 = vmatpush.bf16.msra.mxu0 %v913
    %1222 = vmatmul.bf16.gmra.mxu0 %v306
    %v1223 = vpop.f32.mrf.mxu0
    %v1224 = vadd.f32 %v1211, %v1223
    %v1225 = vpop.f32.mrf.mxu0
    %1226 = vdwg.mxu0
    %1227 = vmatpush.bf16.msra.mxu0 %v928
    %1228 = vmatpush.bf16.msra.mxu0 %v927
    %1229 = vmatpush.bf16.msra.mxu0 %v926
    %1230 = vmatpush.bf16.msra.mxu0 %v925
    %1231 = vmatpush.bf16.msra.mxu0 %v924
    %1232 = vmatpush.bf16.msra.mxu0 %v923
    %1233 = vmatpush.bf16.msra.mxu0 %v922
    %1234 = vmatpush.bf16.msra.mxu0 %v921
    %1235 = vmatmul.bf16.gmra.mxu0 %v307
    %v1236 = vpop.f32.mrf.mxu0
    %v1237 = vadd.f32 %v1224, %v1236
    %v1238 = vpop.f32.mrf.mxu0
    %1239 = vdwg.mxu0
    %1240 = vmatpush.bf16.msra.mxu0 %v936
    %1241 = vmatpush.bf16.msra.mxu0 %v935
    %1242 = vmatpush.bf16.msra.mxu0 %v934
    %1243 = vmatpush.bf16.msra.mxu0 %v933
    %1244 = vmatpush.bf16.msra.mxu0 %v932
    %1245 = vmatpush.bf16.msra.mxu0 %v931
    %1246 = vmatpush.bf16.msra.mxu0 %v930
    %1247 = vmatpush.bf16.msra.mxu0 %v929
    %1248 = vmatmul.bf16.gmra.mxu0 %v308
    %v1249 = vpop.f32.mrf.mxu0
    %v1250 = vadd.f32 %v1237, %v1249
    %v1251 = vpop.f32.mrf.mxu0
    %1252 = vdwg.mxu0
    %1253 = vmatpush.bf16.msra.mxu0 %v944
    %1254 = vmatpush.bf16.msra.mxu0 %v943
    %1255 = vmatpush.bf16.msra.mxu0 %v942
    %1256 = vmatpush.bf16.msra.mxu0 %v941
    %1257 = vmatpush.bf16.msra.mxu0 %v940
    %1258 = vmatpush.bf16.msra.mxu0 %v939
    %1259 = vmatpush.bf16.msra.mxu0 %v938
    %1260 = vmatpush.bf16.msra.mxu0 %v937
    %1261 = vmatmul.bf16.gmra.mxu0 %v309
    %v1262 = vpop.f32.mrf.mxu0
    %v1263 = vadd.f32 %v1250, %v1262
    %v1264 = vpop.f32.mrf.mxu0
    %1265 = vdwg.mxu0
    %1266 = vmatpush.bf16.msra.mxu0 %v952
    %1267 = vmatpush.bf16.msra.mxu0 %v951
    %1268 = vmatpush.bf16.msra.mxu0 %v950
    %1269 = vmatpush.bf16.msra.mxu0 %v949
    %1270 = vmatpush.bf16.msra.mxu0 %v948
    %1271 = vmatpush.bf16.msra.mxu0 %v947
    %1272 = vmatpush.bf16.msra.mxu0 %v946
    %1273 = vmatpush.bf16.msra.mxu0 %v945
    %1274 = vmatmul.bf16.gmra.mxu0 %v310
    %v1275 = vpop.f32.mrf.mxu0
    %v1276 = vadd.f32 %v1263, %v1275
    %v1277 = vpop.f32.mrf.mxu0
    %1278 = vdwg.mxu0
    %1279 = vmatpush.bf16.msra.mxu0 %v960
    %1280 = vmatpush.bf16.msra.mxu0 %v959
    %1281 = vmatpush.bf16.msra.mxu0 %v958
    %1282 = vmatpush.bf16.msra.mxu0 %v957
    %1283 = vmatpush.bf16.msra.mxu0 %v956
    %1284 = vmatpush.bf16.msra.mxu0 %v955
    %1285 = vmatpush.bf16.msra.mxu0 %v954
    %1286 = vmatpush.bf16.msra.mxu0 %v953
    %1287 = vmatmul.bf16.gmra.mxu0 %v311
    %v1288 = vpop.f32.mrf.mxu0
    %v1289 = vadd.f32 %v1276, %v1288
    %v1290 = vpop.f32.mrf.mxu0
    %1291 = vdwg.mxu0
    %1292 = vmatpush.bf16.msra.mxu0 %v968
    %1293 = vmatpush.bf16.msra.mxu0 %v967
    %1294 = vmatpush.bf16.msra.mxu0 %v966
    %1295 = vmatpush.bf16.msra.mxu0 %v965
    %1296 = vmatpush.bf16.msra.mxu0 %v964
    %1297 = vmatpush.bf16.msra.mxu0 %v963
    %1298 = vmatpush.bf16.msra.mxu0 %v962
    %1299 = vmatpush.bf16.msra.mxu0 %v961
    %1300 = vmatmul.bf16.gmra.mxu0 %v312
    %v1301 = vpop.f32.mrf.mxu0
    %v1302 = vadd.f32 %v1289, %v1301
    %v1303 = vpop.f32.mrf.mxu0
    %1304 = vdwg.mxu0
    %1305 = vst [vmem:[#allocation5] sm:$0x3] %v1302
    // Predicated region
    $region18: #{neuralnet_forward.1} parent=1 // pred_check
      _
    $region19: #{neuralnet_forward.1} parent=1 // pred_check_branch
      %1307 = sbr.rel (0) target = $region21
    $region20: #{neuralnet_forward.1} parent=1 // pred_region
      %1309 = vsyncadd [#allocation4], 0
      %s1311 = sshll.u32 [#allocation5], 4
      %s1312 = int_to_ptr.vmem [resolvable:$true] %s1311
      %s1313 = sshll.u32 %s3, 4
      %s1314 = int_to_ptr.hbm [resolvable:$true] %s1313
      %1316 = dma.vmem_to_hbm [thread:$0]  %s1312, 32, %s1314, [#allocation4]
    $region21: #{neuralnet_forward.1} parent=1 // pred_fallthru
      _
    // Predicated region
    $region22: #{neuralnet_forward.1} parent=1 // pred_check
      _
    $region23: #{neuralnet_forward.1} parent=1 // pred_check_branch
      %1318 = sbr.rel (0) target = $region25
    $region24: #{neuralnet_forward.1} parent=1 // pred_region
      %1320 = dma.done [#allocation4], 32
    $region25: #{neuralnet_forward.1} parent=1 // pred_fallthru
      _
    %1321 = vsyncpa [#allocation3], 1
    %1322 = vsyncpa [#allocation4], 1

</llo_original>
